<compile_context>
chip_gen: v5e
topology: v5e:2x2
jax: 0.10.0
libtpu: 0.0.40
codegen_flags: <defaults>
</compile_context>

<pallas_src>
import jax
import jax.numpy as jnp
from jax.experimental import pallas as pl
from jax.experimental.pallas import tpu as pltpu


def _round_up(x, m):
    return ((x + m - 1) // m) * m


def qnet_kernel(alpha_ref,                       # SMEM (4,) PReLU slopes (scalar prefetch)
                x_ref,
                w1_ref, b1_ref, w2_ref, b2_ref,
                w3_ref, b3_ref, w4_ref, b4_ref,
                wf_ref, bf_ref,
                o_ref):
    # Read PReLU slopes (SMEM scalars) once per grid step.
    a1 = alpha_ref[0]
    a2 = alpha_ref[1]
    a3 = alpha_ref[2]
    a4 = alpha_ref[3]

    def prelu(v, a):
        # max(v,0) + a*min(v,0): pure VPU mul/add, no compare+select.
        return jnp.maximum(v, 0.0) + a * jnp.minimum(v, 0.0)

    def linear(h, w_ref, b_ref):
        return jnp.dot(h, w_ref[...], preferred_element_type=jnp.float32) + b_ref[...]

    h = x_ref[...]
    h = prelu(linear(h, w1_ref, b1_ref), a1)
    h = prelu(linear(h, w2_ref, b2_ref), a2)
    h = prelu(linear(h, w3_ref, b3_ref), a3)
    h = prelu(linear(h, w4_ref, b4_ref), a4)
    o_ref[...] = linear(h, wf_ref, bf_ref).astype(o_ref.dtype)


def qnetwork_forward(x, params, *, block_batch=1024):
    """x: (B, input_dim) f32. params: weights (in,out), biases (1,out), alphas (4,)."""
    B, input_dim = x.shape
    hidden_dim = params["w1"].shape[1]
    out_dim = params["wf"].shape[1]

    LANE, SUB = 128, 8
    d_in = _round_up(input_dim, LANE)
    d_h = _round_up(hidden_dim, LANE)
    d_out = _round_up(out_dim, LANE)

    # Batch tile: biggest tile that fits comfortably in VMEM on every gen.
    # Per step: 2x(TB,d_in) + 2x(TB,d_out) f32 double-buffered tiles plus
    # ~TB*d_h intermediates + resident weights -> TB<=1024 is safe everywhere.
    tb = _round_up(min(block_batch, _round_up(B, SUB)), SUB)
    b_pad = _round_up(B, tb)

    def pad2(a, rows, cols):
        return jnp.pad(a, ((0, rows - a.shape[0]), (0, cols - a.shape[1])))

    xp = pad2(x.astype(jnp.float32), b_pad, d_in)
    w1 = pad2(params["w1"], d_in, d_h)
    w2 = pad2(params["w2"], d_h, d_h)
    w3 = pad2(params["w3"], d_h, d_h)
    w4 = pad2(params["w4"], d_h, d_h)
    wf = pad2(params["wf"], d_h, d_out)
    b1 = pad2(params["b1"], 1, d_h)
    b2 = pad2(params["b2"], 1, d_h)
    b3 = pad2(params["b3"], 1, d_h)
    b4 = pad2(params["b4"], 1, d_h)
    bf = pad2(params["bf"], 1, d_out)

    grid = (b_pad // tb,)

    def resident(shape):
        # Same block index every grid step -> stays VMEM-resident (loaded once).
        return pl.BlockSpec(shape, lambda i, alphas: (0, 0))

    in_specs = [
        pl.BlockSpec((tb, d_in), lambda i, alphas: (i, 0)),   # streamed x tile
        resident((d_in, d_h)), resident((1, d_h)),
        resident((d_h, d_h)), resident((1, d_h)),
        resident((d_h, d_h)), resident((1, d_h)),
        resident((d_h, d_h)), resident((1, d_h)),
        resident((d_h, d_out)), resident((1, d_out)),
    ]
    out_specs = pl.BlockSpec((tb, d_out), lambda i, alphas: (i, 0))

    out = pl.pallas_call(
        qnet_kernel,
        out_shape=jax.ShapeDtypeStruct((b_pad, d_out), jnp.float32),
        grid_spec=pltpu.PrefetchScalarGridSpec(
            num_scalar_prefetch=1,          # alphas -> SMEM, passed first to kernel
            grid=grid,
            in_specs=in_specs,
            out_specs=out_specs,
        ),
        compiler_params=pltpu.CompilerParams(
            dimension_semantics=("parallel",),   # batch tiles independent (v7x: 2 TCs)
        ),
    )(
        params["alphas"], xp,
        w1, b1, w2, b2, w3, b3, w4, b4, wf, bf,
    )
    return out[:B, :out_dim]


def init_params(key, input_dim, output_dim, hidden_dim):
    """Deterministic init mimicking PyTorch nn.Linear (uniform +/- 1/sqrt(fan_in))
    and nn.PReLU (init=0.25, num_parameters=1 per layer)."""
    def linear_init(k, fan_in, fan_out):
        kw, kb = jax.random.split(k)
        bound = 1.0 / jnp.sqrt(fan_in)
        w = jax.random.uniform(kw, (fan_in, fan_out), jnp.float32, -bound, bound)
        b = jax.random.uniform(kb, (1, fan_out), jnp.float32, -bound, bound)
        return w, b

    k1, k2, k3, k4, kf = jax.random.split(key, 5)
    w1, b1 = linear_init(k1, input_dim, hidden_dim)
    w2, b2 = linear_init(k2, hidden_dim, hidden_dim)
    w3, b3 = linear_init(k3, hidden_dim, hidden_dim)
    w4, b4 = linear_init(k4, hidden_dim, hidden_dim)
    wf, bf = linear_init(kf, hidden_dim, output_dim)
    alphas = jnp.full((4,), 0.25, dtype=jnp.float32)  # PReLU default slope
    return dict(w1=w1, b1=b1, w2=w2, b2=b2, w3=w3, b3=b3, w4=w4, b4=b4,
                wf=wf, bf=bf, alphas=alphas)


def reference_forward(x, p):
    def prelu(v, a):
        return jnp.where(v > 0, v, a * v)
    h = prelu(x @ p["w1"] + p["b1"], p["alphas"][0])
    h = prelu(h @ p["w2"] + p["b2"], p["alphas"][1])
    h = prelu(h @ p["w3"] + p["b3"], p["alphas"][2])
    h = prelu(h @ p["w4"] + p["b4"], p["alphas"][3])
    return h @ p["wf"] + p["bf"]


if __name__ == "__main__":
    key = jax.random.PRNGKey(0)
    kx, kp, kx2 = jax.random.split(key, 3)

    batch, input_dim, output_dim, hidden_dim = 8, 16, 4, 32
    x = jax.random.normal(kx, (batch, input_dim), dtype=jnp.float32)
    params = init_params(kp, input_dim, output_dim, hidden_dim)

    # Small-batch check (single grid step).
    out = jax.block_until_ready(qnetwork_forward(x, params))
    ref = reference_forward(x, params)
    assert out.shape == (batch, output_dim)
    assert jnp.allclose(out, ref, atol=2e-5, rtol=2e-5), "mismatch vs reference (small batch)"

    # Multi-tile check: exercises the batch grid, resident weights, and
    # batch-row padding (200 rows -> 4 tiles of 64 with 56 padded rows).
    x2 = jax.random.normal(kx2, (200, input_dim), dtype=jnp.float32)
    out2 = jax.block_until_ready(qnetwork_forward(x2, params, block_batch=64))
    ref2 = reference_forward(x2, params)
    assert out2.shape == (200, output_dim)
    assert jnp.allclose(out2, ref2, atol=2e-5, rtol=2e-5), "mismatch vs reference (gridded batch)"

    print("KERNEL_OK")
</pallas_src>

<mosaic_0001>
module attributes {stable_mosaic.version = 11 : i64} {
  func.func @qnet_kernel(%arg0: i32, %arg1: memref<4xf32, #tpu.memory_space<smem>>, %arg2: memref<8x128xf32, #tpu.memory_space<vmem>>, %arg3: memref<128x128xf32, #tpu.memory_space<vmem>>, %arg4: memref<1x128xf32, #tpu.memory_space<vmem>>, %arg5: memref<128x128xf32, #tpu.memory_space<vmem>>, %arg6: memref<1x128xf32, #tpu.memory_space<vmem>>, %arg7: memref<128x128xf32, #tpu.memory_space<vmem>>, %arg8: memref<1x128xf32, #tpu.memory_space<vmem>>, %arg9: memref<128x128xf32, #tpu.memory_space<vmem>>, %arg10: memref<1x128xf32, #tpu.memory_space<vmem>>, %arg11: memref<128x128xf32, #tpu.memory_space<vmem>>, %arg12: memref<1x128xf32, #tpu.memory_space<vmem>>, %arg13: memref<8x128xf32, #tpu.memory_space<vmem>>) attributes {dimension_semantics = [#tpu.dimension_semantics<parallel>], iteration_bounds = array<i64: 1>, scalar_prefetch = 1 : i64, scratch_operands = 0 : i64, tpu.core_type = #tpu.core_type<tc>, window_params = [{transform_indices = @transform_0, window_bounds = array<i64: 8, 128>}, {pipeline_mode = #tpu.pipeline_mode<synchronous>, transform_indices = @transform_1, window_bounds = array<i64: 128, 128>}, {pipeline_mode = #tpu.pipeline_mode<synchronous>, transform_indices = @transform_2, window_bounds = array<i64: 1, 128>}, {pipeline_mode = #tpu.pipeline_mode<synchronous>, transform_indices = @transform_3, window_bounds = array<i64: 128, 128>}, {pipeline_mode = #tpu.pipeline_mode<synchronous>, transform_indices = @transform_4, window_bounds = array<i64: 1, 128>}, {pipeline_mode = #tpu.pipeline_mode<synchronous>, transform_indices = @transform_5, window_bounds = array<i64: 128, 128>}, {pipeline_mode = #tpu.pipeline_mode<synchronous>, transform_indices = @transform_6, window_bounds = array<i64: 1, 128>}, {pipeline_mode = #tpu.pipeline_mode<synchronous>, transform_indices = @transform_7, window_bounds = array<i64: 128, 128>}, {pipeline_mode = #tpu.pipeline_mode<synchronous>, transform_indices = @transform_8, window_bounds = array<i64: 1, 128>}, {pipeline_mode = #tpu.pipeline_mode<synchronous>, transform_indices = @transform_9, window_bounds = array<i64: 128, 128>}, {pipeline_mode = #tpu.pipeline_mode<synchronous>, transform_indices = @transform_10, window_bounds = array<i64: 1, 128>}, {transform_indices = @transform_11, window_bounds = array<i64: 8, 128>}]} {
    %c0 = arith.constant 0 : index
    %0 = memref.load %arg1[%c0] : memref<4xf32, #tpu.memory_space<smem>>
    %c1 = arith.constant 1 : index
    %1 = memref.load %arg1[%c1] : memref<4xf32, #tpu.memory_space<smem>>
    %c2 = arith.constant 2 : index
    %2 = memref.load %arg1[%c2] : memref<4xf32, #tpu.memory_space<smem>>
    %c3 = arith.constant 3 : index
    %3 = memref.load %arg1[%c3] : memref<4xf32, #tpu.memory_space<smem>>
    %c0_0 = arith.constant 0 : index
    %c0_1 = arith.constant 0 : index
    %4 = vector.load %arg2[%c0_0, %c0_1] : memref<8x128xf32, #tpu.memory_space<vmem>>, vector<8x128xf32>
    %c0_2 = arith.constant 0 : index
    %c0_3 = arith.constant 0 : index
    %5 = vector.load %arg3[%c0_2, %c0_3] : memref<128x128xf32, #tpu.memory_space<vmem>>, vector<128x128xf32>
    %cst = arith.constant dense<0.000000e+00> : vector<8x128xf32>
    %6 = tpu.matmul %4, %5, %cst {dimension_numbers = #tpu.dot_dimension_numbers<[1], [0], [0], [1], [0, 0, 1, 1], [], []>} : vector<8x128xf32>, vector<128x128xf32>, vector<8x128xf32> -> vector<8x128xf32>
    %c0_4 = arith.constant 0 : index
    %c0_5 = arith.constant 0 : index
    %7 = vector.load %arg4[%c0_4, %c0_5] : memref<1x128xf32, #tpu.memory_space<vmem>>, vector<1x128xf32>
    %8 = vector.broadcast %7 : vector<1x128xf32> to vector<8x128xf32>
    %9 = arith.addf %6, %8 : vector<8x128xf32>
    %cst_6 = arith.constant 0.000000e+00 : f32
    %10 = vector.broadcast %cst_6 : f32 to vector<8x128xf32>
    %11 = arith.maximumf %9, %10 : vector<8x128xf32>
    %cst_7 = arith.constant 0.000000e+00 : f32
    %12 = vector.broadcast %cst_7 : f32 to vector<8x128xf32>
    %13 = arith.minimumf %9, %12 : vector<8x128xf32>
    %14 = vector.broadcast %0 : f32 to vector<8x128xf32>
    %15 = arith.mulf %14, %13 : vector<8x128xf32>
    %16 = arith.addf %11, %15 : vector<8x128xf32>
    %c0_8 = arith.constant 0 : index
    %c0_9 = arith.constant 0 : index
    %17 = vector.load %arg5[%c0_8, %c0_9] : memref<128x128xf32, #tpu.memory_space<vmem>>, vector<128x128xf32>
    %cst_10 = arith.constant dense<0.000000e+00> : vector<8x128xf32>
    %18 = tpu.matmul %16, %17, %cst_10 {dimension_numbers = #tpu.dot_dimension_numbers<[1], [0], [0], [1], [0, 0, 1, 1], [], []>} : vector<8x128xf32>, vector<128x128xf32>, vector<8x128xf32> -> vector<8x128xf32>
    %c0_11 = arith.constant 0 : index
    %c0_12 = arith.constant 0 : index
    %19 = vector.load %arg6[%c0_11, %c0_12] : memref<1x128xf32, #tpu.memory_space<vmem>>, vector<1x128xf32>
    %20 = vector.broadcast %19 : vector<1x128xf32> to vector<8x128xf32>
    %21 = arith.addf %18, %20 : vector<8x128xf32>
    %cst_13 = arith.constant 0.000000e+00 : f32
    %22 = vector.broadcast %cst_13 : f32 to vector<8x128xf32>
    %23 = arith.maximumf %21, %22 : vector<8x128xf32>
    %cst_14 = arith.constant 0.000000e+00 : f32
    %24 = vector.broadcast %cst_14 : f32 to vector<8x128xf32>
    %25 = arith.minimumf %21, %24 : vector<8x128xf32>
    %26 = vector.broadcast %1 : f32 to vector<8x128xf32>
    %27 = arith.mulf %26, %25 : vector<8x128xf32>
    %28 = arith.addf %23, %27 : vector<8x128xf32>
    %c0_15 = arith.constant 0 : index
    %c0_16 = arith.constant 0 : index
    %29 = vector.load %arg7[%c0_15, %c0_16] : memref<128x128xf32, #tpu.memory_space<vmem>>, vector<128x128xf32>
    %cst_17 = arith.constant dense<0.000000e+00> : vector<8x128xf32>
    %30 = tpu.matmul %28, %29, %cst_17 {dimension_numbers = #tpu.dot_dimension_numbers<[1], [0], [0], [1], [0, 0, 1, 1], [], []>} : vector<8x128xf32>, vector<128x128xf32>, vector<8x128xf32> -> vector<8x128xf32>
    %c0_18 = arith.constant 0 : index
    %c0_19 = arith.constant 0 : index
    %31 = vector.load %arg8[%c0_18, %c0_19] : memref<1x128xf32, #tpu.memory_space<vmem>>, vector<1x128xf32>
    %32 = vector.broadcast %31 : vector<1x128xf32> to vector<8x128xf32>
    %33 = arith.addf %30, %32 : vector<8x128xf32>
    %cst_20 = arith.constant 0.000000e+00 : f32
    %34 = vector.broadcast %cst_20 : f32 to vector<8x128xf32>
    %35 = arith.maximumf %33, %34 : vector<8x128xf32>
    %cst_21 = arith.constant 0.000000e+00 : f32
    %36 = vector.broadcast %cst_21 : f32 to vector<8x128xf32>
    %37 = arith.minimumf %33, %36 : vector<8x128xf32>
    %38 = vector.broadcast %2 : f32 to vector<8x128xf32>
    %39 = arith.mulf %38, %37 : vector<8x128xf32>
    %40 = arith.addf %35, %39 : vector<8x128xf32>
    %c0_22 = arith.constant 0 : index
    %c0_23 = arith.constant 0 : index
    %41 = vector.load %arg9[%c0_22, %c0_23] : memref<128x128xf32, #tpu.memory_space<vmem>>, vector<128x128xf32>
    %cst_24 = arith.constant dense<0.000000e+00> : vector<8x128xf32>
    %42 = tpu.matmul %40, %41, %cst_24 {dimension_numbers = #tpu.dot_dimension_numbers<[1], [0], [0], [1], [0, 0, 1, 1], [], []>} : vector<8x128xf32>, vector<128x128xf32>, vector<8x128xf32> -> vector<8x128xf32>
    %c0_25 = arith.constant 0 : index
    %c0_26 = arith.constant 0 : index
    %43 = vector.load %arg10[%c0_25, %c0_26] : memref<1x128xf32, #tpu.memory_space<vmem>>, vector<1x128xf32>
    %44 = vector.broadcast %43 : vector<1x128xf32> to vector<8x128xf32>
    %45 = arith.addf %42, %44 : vector<8x128xf32>
    %cst_27 = arith.constant 0.000000e+00 : f32
    %46 = vector.broadcast %cst_27 : f32 to vector<8x128xf32>
    %47 = arith.maximumf %45, %46 : vector<8x128xf32>
    %cst_28 = arith.constant 0.000000e+00 : f32
    %48 = vector.broadcast %cst_28 : f32 to vector<8x128xf32>
    %49 = arith.minimumf %45, %48 : vector<8x128xf32>
    %50 = vector.broadcast %3 : f32 to vector<8x128xf32>
    %51 = arith.mulf %50, %49 : vector<8x128xf32>
    %52 = arith.addf %47, %51 : vector<8x128xf32>
    %c0_29 = arith.constant 0 : index
    %c0_30 = arith.constant 0 : index
    %53 = vector.load %arg11[%c0_29, %c0_30] : memref<128x128xf32, #tpu.memory_space<vmem>>, vector<128x128xf32>
    %cst_31 = arith.constant dense<0.000000e+00> : vector<8x128xf32>
    %54 = tpu.matmul %52, %53, %cst_31 {dimension_numbers = #tpu.dot_dimension_numbers<[1], [0], [0], [1], [0, 0, 1, 1], [], []>} : vector<8x128xf32>, vector<128x128xf32>, vector<8x128xf32> -> vector<8x128xf32>
    %c0_32 = arith.constant 0 : index
    %c0_33 = arith.constant 0 : index
    %55 = vector.load %arg12[%c0_32, %c0_33] : memref<1x128xf32, #tpu.memory_space<vmem>>, vector<1x128xf32>
    %56 = vector.broadcast %55 : vector<1x128xf32> to vector<8x128xf32>
    %57 = arith.addf %54, %56 : vector<8x128xf32>
    %c0_34 = arith.constant 0 : index
    %c0_35 = arith.constant 0 : index
    %58 = vector.load %arg13[%c0_34, %c0_35] : memref<8x128xf32, #tpu.memory_space<vmem>>, vector<8x128xf32>
    tpu.vector_store %arg13[%c0_34, %c0_35], %57 {strides = array<i32>} : memref<8x128xf32, #tpu.memory_space<vmem>>, vector<8x128xf32>,
    return
  }
  func.func @transform_0(%arg0: i32, %arg1: memref<4xf32, #tpu.memory_space<smem>>) -> (i32, i32) {
    %c0_i32 = arith.constant 0 : i32
    %c0_i32_0 = arith.constant 0 : i32
    return %arg0, %c0_i32 : i32, i32
  }
  func.func @transform_1(%arg0: i32, %arg1: memref<4xf32, #tpu.memory_space<smem>>) -> (i32, i32) {
    %c0_i32 = arith.constant 0 : i32
    %c0_i32_0 = arith.constant 0 : i32
    %c0_i32_1 = arith.constant 0 : i32
    return %c0_i32, %c0_i32_0 : i32, i32
  }
  func.func @transform_2(%arg0: i32, %arg1: memref<4xf32, #tpu.memory_space<smem>>) -> (i32, i32) {
    %c0_i32 = arith.constant 0 : i32
    %c0_i32_0 = arith.constant 0 : i32
    %c0_i32_1 = arith.constant 0 : i32
    return %c0_i32, %c0_i32_0 : i32, i32
  }
  func.func @transform_3(%arg0: i32, %arg1: memref<4xf32, #tpu.memory_space<smem>>) -> (i32, i32) {
    %c0_i32 = arith.constant 0 : i32
    %c0_i32_0 = arith.constant 0 : i32
    %c0_i32_1 = arith.constant 0 : i32
    return %c0_i32, %c0_i32_0 : i32, i32
  }
  func.func @transform_4(%arg0: i32, %arg1: memref<4xf32, #tpu.memory_space<smem>>) -> (i32, i32) {
    %c0_i32 = arith.constant 0 : i32
    %c0_i32_0 = arith.constant 0 : i32
    %c0_i32_1 = arith.constant 0 : i32
    return %c0_i32, %c0_i32_0 : i32, i32
  }
  func.func @transform_5(%arg0: i32, %arg1: memref<4xf32, #tpu.memory_space<smem>>) -> (i32, i32) {
    %c0_i32 = arith.constant 0 : i32
    %c0_i32_0 = arith.constant 0 : i32
    %c0_i32_1 = arith.constant 0 : i32
    return %c0_i32, %c0_i32_0 : i32, i32
  }
  func.func @transform_6(%arg0: i32, %arg1: memref<4xf32, #tpu.memory_space<smem>>) -> (i32, i32) {
    %c0_i32 = arith.constant 0 : i32
    %c0_i32_0 = arith.constant 0 : i32
    %c0_i32_1 = arith.constant 0 : i32
    return %c0_i32, %c0_i32_0 : i32, i32
  }
  func.func @transform_7(%arg0: i32, %arg1: memref<4xf32, #tpu.memory_space<smem>>) -> (i32, i32) {
    %c0_i32 = arith.constant 0 : i32
    %c0_i32_0 = arith.constant 0 : i32
    %c0_i32_1 = arith.constant 0 : i32
    return %c0_i32, %c0_i32_0 : i32, i32
  }
  func.func @transform_8(%arg0: i32, %arg1: memref<4xf32, #tpu.memory_space<smem>>) -> (i32, i32) {
    %c0_i32 = arith.constant 0 : i32
    %c0_i32_0 = arith.constant 0 : i32
    %c0_i32_1 = arith.constant 0 : i32
    return %c0_i32, %c0_i32_0 : i32, i32
  }
  func.func @transform_9(%arg0: i32, %arg1: memref<4xf32, #tpu.memory_space<smem>>) -> (i32, i32) {
    %c0_i32 = arith.constant 0 : i32
    %c0_i32_0 = arith.constant 0 : i32
    %c0_i32_1 = arith.constant 0 : i32
    return %c0_i32, %c0_i32_0 : i32, i32
  }
  func.func @transform_10(%arg0: i32, %arg1: memref<4xf32, #tpu.memory_space<smem>>) -> (i32, i32) {
    %c0_i32 = arith.constant 0 : i32
    %c0_i32_0 = arith.constant 0 : i32
    %c0_i32_1 = arith.constant 0 : i32
    return %c0_i32, %c0_i32_0 : i32, i32
  }
  func.func @transform_11(%arg0: i32, %arg1: memref<4xf32, #tpu.memory_space<smem>>) -> (i32, i32) {
    %c0_i32 = arith.constant 0 : i32
    %c0_i32_0 = arith.constant 0 : i32
    return %arg0, %c0_i32 : i32, i32
  }
}

</mosaic_0001>

<llo_original>
// kernel: tpu_custom_call.1
$region0: #{tpu_custom_call.1}
  #allocation0 [shape = 'u32[]', space=smem, size = 0x4, offset = 0x4, fixed_abs, tag = 'smem constant byte address 0x4 - core index']
  #allocation1 [shape = 'u32[72,128]{1,0:T(1,128)}', space=vmem, size = 0x9000, scoped, tag = 'internal scratch']
  #allocation2 [shape = 's32[1]{0}', space=sflag, size = 0x4, scoped, tag = 'scoped memory for tpu_custom_call.1']
  #allocation3 [shape = 'u8[512]{0}', space=smem, size = 0x200, scoped, tag = 'prefetched SMEM operand 0']
  %s0 = inlined_call_operand.hbm [shape: f32[4], index: 0, kind: input, shape index: {}]
  %s1 = inlined_call_operand.hbm [shape: f32[8,128], index: 1, kind: input, shape index: {}]
  %s2 = inlined_call_operand.hbm [shape: f32[128,128], index: 2, kind: input, shape index: {}]
  %s3 = inlined_call_operand.vmem [shape: f32[1,128], index: 3, kind: input, shape index: {}]
  %s4 = inlined_call_operand.hbm [shape: f32[128,128], index: 4, kind: input, shape index: {}]
  %s5 = inlined_call_operand.vmem [shape: f32[1,128], index: 5, kind: input, shape index: {}]
  %s6 = inlined_call_operand.hbm [shape: f32[128,128], index: 6, kind: input, shape index: {}]
  %s7 = inlined_call_operand.vmem [shape: f32[1,128], index: 7, kind: input, shape index: {}]
  %s8 = inlined_call_operand.hbm [shape: f32[128,128], index: 8, kind: input, shape index: {}]
  %s9 = inlined_call_operand.vmem [shape: f32[1,128], index: 9, kind: input, shape index: {}]
  %s10 = inlined_call_operand.hbm [shape: f32[128,128], index: 10, kind: input, shape index: {}]
  %s11 = inlined_call_operand.vmem [shape: f32[1,128], index: 11, kind: input, shape index: {}]
  %s12 = inlined_call_operand.hbm [shape: f32[8,128], index: 12, kind: output, shape index: {}]
  %s13 = sld [smem:[#allocation0]]
  $region78: #{tpu_custom_call.1} parent=0
    _
  %s15 = ssub.s32 1, %s13
  %s16 = scalar_select 0, %s15, %s13
  %s18 = sshll.u32 %s0, 4
  %s19 = int_to_ptr.hbm [resolvable:$true] %s18
  %21 = dma.hbm_to_smem %s19, 16, [#allocation3], [#allocation2]
  %23 = dma.done [#allocation2], 16
  %24 = sfence
  $region1: #{tpu_custom_call.1} parent=0
    #allocation4 [shape = 'u8[4096]{0}', space=vmem, size = 0x1000, scoped, tag = 'input window, operand 1, single buffered']
    #allocation5 [shape = 's32[1]{0}', space=sflag, size = 0x4, scoped, tag = 'scoped memory for tpu_custom_call.1']
    #allocation6 [shape = 's32[1]{0}', space=sflag, size = 0x4, scoped, tag = 'scoped memory for tpu_custom_call.1']
    #allocation7 [shape = 'u8[65536]{0}', space=vmem, size = 0x10000, scoped, tag = 'input window, operand 2, single buffered']
    #allocation8 [shape = 's32[1]{0}', space=sflag, size = 0x4, scoped, tag = 'scoped memory for tpu_custom_call.1']
    #allocation9 [shape = 'u8[65536]{0}', space=vmem, size = 0x10000, scoped, tag = 'input window, operand 4, single buffered']
    #allocation10 [shape = 'u8[65536]{0}', space=vmem, size = 0x10000, scoped, tag = 'input window, operand 6, single buffered']
    #allocation11 [shape = 's32[1]{0}', space=sflag, size = 0x4, scoped, tag = 'scoped memory for tpu_custom_call.1']
    #allocation12 [shape = 'u8[65536]{0}', space=vmem, size = 0x10000, scoped, tag = 'input window, operand 8, single buffered']
    #allocation13 [shape = 'u8[65536]{0}', space=vmem, size = 0x10000, scoped, tag = 'input window, operand 10, single buffered']
    #allocation14 [shape = 's32[1]{0}', space=sflag, size = 0x4, scoped, tag = 'scoped memory for tpu_custom_call.1']
    #allocation15 [shape = 'u8[4096]{0}', space=vmem, size = 0x1000, scoped, tag = 'output window, operand 0, single buffered']
    %25 = vsyncpa [#allocation5], 0
    %26 = vsyncpa [#allocation8], 0
    %27 = vsyncpa [#allocation11], 0
    %28 = vsyncpa [#allocation14], 0
    %29 = vsyncpa [#allocation6], 0
    // Predicated region
    $region2: #{tpu_custom_call.1} parent=1 // pred_check
      _
    $region3: #{tpu_custom_call.1} parent=1 // pred_check_branch
      %31 = sbr.rel (0) target = $region5
    $region4: #{tpu_custom_call.1} parent=1 // pred_region
      %33 = vsyncadd [#allocation5], 0
      %s35 = sshll.u32 %s1, 4
      %s36 = int_to_ptr.hbm [resolvable:$true] %s35
      %s37 = sshll.u32 [#allocation4], 4
      %s38 = int_to_ptr.vmem [resolvable:$true] %s37
      %40 = dma.hbm_to_vmem [thread:$0]  %s36, 128, %s38, [#allocation5]
    $region5: #{tpu_custom_call.1} parent=1 // pred_fallthru
      _
    // Predicated region
    $region6: #{tpu_custom_call.1} parent=1 // pred_check
      _
    $region7: #{tpu_custom_call.1} parent=1 // pred_check_branch
      %42 = sbr.rel (0) target = $region9
    $region8: #{tpu_custom_call.1} parent=1 // pred_region
      %44 = vsyncadd [#allocation8], 0
      %s45 = sshll.u32 %s2, 4
      %s46 = int_to_ptr.hbm [resolvable:$true] %s45
      %s47 = sshll.u32 [#allocation7], 4
      %s48 = int_to_ptr.vmem [resolvable:$true] %s47
      %53 = dma.hbm_to_vmem [thread:$0]  %s46, 2048, %s48, [#allocation8], 128, 128, 8
    $region9: #{tpu_custom_call.1} parent=1 // pred_fallthru
      _
    // Predicated region
    $region10: #{tpu_custom_call.1} parent=1 // pred_check
      _
    $region11: #{tpu_custom_call.1} parent=1 // pred_check_branch
      %55 = sbr.rel (0) target = $region13
    $region12: #{tpu_custom_call.1} parent=1 // pred_region
      _
    $region13: #{tpu_custom_call.1} parent=1 // pred_fallthru
      _
    // Predicated region
    $region14: #{tpu_custom_call.1} parent=1 // pred_check
      _
    $region15: #{tpu_custom_call.1} parent=1 // pred_check_branch
      %57 = sbr.rel (0) target = $region17
    $region16: #{tpu_custom_call.1} parent=1 // pred_region
      %59 = vsyncadd [#allocation8], 0
      %s60 = sshll.u32 %s4, 4
      %s61 = int_to_ptr.hbm [resolvable:$true] %s60
      %s62 = sshll.u32 [#allocation9], 4
      %s63 = int_to_ptr.vmem [resolvable:$true] %s62
      %68 = dma.hbm_to_vmem [thread:$0]  %s61, 2048, %s63, [#allocation8], 128, 128, 8
    $region17: #{tpu_custom_call.1} parent=1 // pred_fallthru
      _
    // Predicated region
    $region18: #{tpu_custom_call.1} parent=1 // pred_check
      _
    $region19: #{tpu_custom_call.1} parent=1 // pred_check_branch
      %70 = sbr.rel (0) target = $region21
    $region20: #{tpu_custom_call.1} parent=1 // pred_region
      _
    $region21: #{tpu_custom_call.1} parent=1 // pred_fallthru
      _
    // Predicated region
    $region22: #{tpu_custom_call.1} parent=1 // pred_check
      _
    $region23: #{tpu_custom_call.1} parent=1 // pred_check_branch
      %72 = sbr.rel (0) target = $region25
    $region24: #{tpu_custom_call.1} parent=1 // pred_region
      %74 = vsyncadd [#allocation11], 0
      %s75 = sshll.u32 %s6, 4
      %s76 = int_to_ptr.hbm [resolvable:$true] %s75
      %s77 = sshll.u32 [#allocation10], 4
      %s78 = int_to_ptr.vmem [resolvable:$true] %s77
      %83 = dma.hbm_to_vmem [thread:$0]  %s76, 2048, %s78, [#allocation11], 128, 128, 8
    $region25: #{tpu_custom_call.1} parent=1 // pred_fallthru
      _
    // Predicated region
    $region26: #{tpu_custom_call.1} parent=1 // pred_check
      _
    $region27: #{tpu_custom_call.1} parent=1 // pred_check_branch
      %85 = sbr.rel (0) target = $region29
    $region28: #{tpu_custom_call.1} parent=1 // pred_region
      _
    $region29: #{tpu_custom_call.1} parent=1 // pred_fallthru
      _
    // Predicated region
    $region30: #{tpu_custom_call.1} parent=1 // pred_check
      _
    $region31: #{tpu_custom_call.1} parent=1 // pred_check_branch
      %87 = sbr.rel (0) target = $region33
    $region32: #{tpu_custom_call.1} parent=1 // pred_region
      %89 = vsyncadd [#allocation11], 0
      %s90 = sshll.u32 %s8, 4
      %s91 = int_to_ptr.hbm [resolvable:$true] %s90
      %s92 = sshll.u32 [#allocation12], 4
      %s93 = int_to_ptr.vmem [resolvable:$true] %s92
      %98 = dma.hbm_to_vmem [thread:$0]  %s91, 2048, %s93, [#allocation11], 128, 128, 8
    $region33: #{tpu_custom_call.1} parent=1 // pred_fallthru
      _
    // Predicated region
    $region34: #{tpu_custom_call.1} parent=1 // pred_check
      _
    $region35: #{tpu_custom_call.1} parent=1 // pred_check_branch
      %100 = sbr.rel (0) target = $region37
    $region36: #{tpu_custom_call.1} parent=1 // pred_region
      _
    $region37: #{tpu_custom_call.1} parent=1 // pred_fallthru
      _
    // Predicated region
    $region38: #{tpu_custom_call.1} parent=1 // pred_check
      _
    $region39: #{tpu_custom_call.1} parent=1 // pred_check_branch
      %102 = sbr.rel (0) target = $region41
    $region40: #{tpu_custom_call.1} parent=1 // pred_region
      %104 = vsyncadd [#allocation14], 0
      %s105 = sshll.u32 %s10, 4
      %s106 = int_to_ptr.hbm [resolvable:$true] %s105
      %s107 = sshll.u32 [#allocation13], 4
      %s108 = int_to_ptr.vmem [resolvable:$true] %s107
      %113 = dma.hbm_to_vmem [thread:$0]  %s106, 2048, %s108, [#allocation14], 128, 128, 8
    $region41: #{tpu_custom_call.1} parent=1 // pred_fallthru
      _
    // Predicated region
    $region42: #{tpu_custom_call.1} parent=1 // pred_check
      _
    $region43: #{tpu_custom_call.1} parent=1 // pred_check_branch
      %115 = sbr.rel (0) target = $region45
    $region44: #{tpu_custom_call.1} parent=1 // pred_region
      _
    $region45: #{tpu_custom_call.1} parent=1 // pred_fallthru
      _
    // Predicated region
    $region46: #{tpu_custom_call.1} parent=1 // pred_check
      _
    $region47: #{tpu_custom_call.1} parent=1 // pred_check_branch
      %117 = sbr.rel (0) target = $region49
    $region48: #{tpu_custom_call.1} parent=1 // pred_region
      %119 = dma.done [#allocation5], 128
    $region49: #{tpu_custom_call.1} parent=1 // pred_fallthru
      _
    // Predicated region
    $region50: #{tpu_custom_call.1} parent=1 // pred_check
      _
    $region51: #{tpu_custom_call.1} parent=1 // pred_check_branch
      %121 = sbr.rel (0) target = $region53
    $region52: #{tpu_custom_call.1} parent=1 // pred_region
      %123 = dma.done [#allocation8], 2048
    $region53: #{tpu_custom_call.1} parent=1 // pred_fallthru
      _
    // Predicated region
    $region54: #{tpu_custom_call.1} parent=1 // pred_check
      _
    $region55: #{tpu_custom_call.1} parent=1 // pred_check_branch
      %125 = sbr.rel (0) target = $region57
    $region56: #{tpu_custom_call.1} parent=1 // pred_region
      %127 = dma.done [#allocation8], 2048
    $region57: #{tpu_custom_call.1} parent=1 // pred_fallthru
      _
    // Predicated region
    $region58: #{tpu_custom_call.1} parent=1 // pred_check
      _
    $region59: #{tpu_custom_call.1} parent=1 // pred_check_branch
      %129 = sbr.rel (0) target = $region61
    $region60: #{tpu_custom_call.1} parent=1 // pred_region
      %131 = dma.done [#allocation11], 2048
    $region61: #{tpu_custom_call.1} parent=1 // pred_fallthru
      _
    // Predicated region
    $region62: #{tpu_custom_call.1} parent=1 // pred_check
      _
    $region63: #{tpu_custom_call.1} parent=1 // pred_check_branch
      %133 = sbr.rel (0) target = $region65
    $region64: #{tpu_custom_call.1} parent=1 // pred_region
      %135 = dma.done [#allocation11], 2048
    $region65: #{tpu_custom_call.1} parent=1 // pred_fallthru
      _
    // Predicated region
    $region66: #{tpu_custom_call.1} parent=1 // pred_check
      _
    $region67: #{tpu_custom_call.1} parent=1 // pred_check_branch
      %137 = sbr.rel (0) target = $region69
    $region68: #{tpu_custom_call.1} parent=1 // pred_region
      %139 = dma.done [#allocation14], 2048
    $region69: #{tpu_custom_call.1} parent=1 // pred_fallthru
      _
    %s140 = sld [smem:[#allocation3]]
    %s141 = sld [smem:[#allocation3 + $0x1]]
    %s142 = sld [smem:[#allocation3 + $0x2]]
    %s143 = sld [smem:[#allocation3 + $0x3]]
    %v144 = vld [vmem:[#allocation4] sm:$0xff]
    %v145 = vld [vmem:[#allocation7] sm:$0xff]
    %v146 = vld [vmem:[#allocation7 + $0x8] sm:$0xff]
    %v147 = vld [vmem:[#allocation7 + $0x10] sm:$0xff]
    %v148 = vld [vmem:[#allocation7 + $0x18] sm:$0xff]
    %v149 = vld [vmem:[#allocation7 + $0x20] sm:$0xff]
    %v150 = vld [vmem:[#allocation7 + $0x28] sm:$0xff]
    %v151 = vld [vmem:[#allocation7 + $0x30] sm:$0xff]
    %v152 = vld [vmem:[#allocation7 + $0x38] sm:$0xff]
    %v153 = vld [vmem:[#allocation7 + $0x40] sm:$0xff]
    %v154 = vld [vmem:[#allocation7 + $0x48] sm:$0xff]
    %v155 = vld [vmem:[#allocation7 + $0x50] sm:$0xff]
    %v156 = vld [vmem:[#allocation7 + $0x58] sm:$0xff]
    %v157 = vld [vmem:[#allocation7 + $0x60] sm:$0xff]
    %v158 = vld [vmem:[#allocation7 + $0x68] sm:$0xff]
    %v159 = vld [vmem:[#allocation7 + $0x70] sm:$0xff]
    %v160 = vld [vmem:[#allocation7 + $0x78] sm:$0xff]
    %v161 = vld [vmem:[%s3] sm:$0x1]
    %v163 = vperm.slane %v161, 0
    %165 = vmatpush.msra.mxu0 %v160
    %166 = vmatpush.msra.mxu0 %v159
    %167 = vmatpush.msra.mxu0 %v158
    %168 = vmatpush.msra.mxu0 %v157
    %169 = vmatpush.msra.mxu0 %v156
    %170 = vmatpush.msra.mxu0 %v155
    %171 = vmatpush.msra.mxu0 %v154
    %172 = vmatpush.msra.mxu0 %v153
    %173 = vmatpush.msra.mxu0 %v152
    %174 = vmatpush.msra.mxu0 %v151
    %175 = vmatpush.msra.mxu0 %v150
    %176 = vmatpush.msra.mxu0 %v149
    %177 = vmatpush.msra.mxu0 %v148
    %178 = vmatpush.msra.mxu0 %v147
    %179 = vmatpush.msra.mxu0 %v146
    %180 = vmatpush.msra.mxu0 %v145
    %181 = vmatmul.f32.gmra.mxu0 %v144
    %v182 = vpop.f32.mrf.mxu0
    %v183 = vadd.f32 %v163, %v182
    %184 = vdwg.mxu0
    %v185 = vmax.f32 %v183, 0.0
    %v186 = vmin.f32 %v183, 0.0
    %v187 = vstv %s140
    %v188 = vmul.f32 %v187, %v186
    %v189 = vadd.f32 %v185, %v188
    %v190 = vld [vmem:[#allocation9] sm:$0xff]
    %v191 = vld [vmem:[#allocation9 + $0x8] sm:$0xff]
    %v192 = vld [vmem:[#allocation9 + $0x10] sm:$0xff]
    %v193 = vld [vmem:[#allocation9 + $0x18] sm:$0xff]
    %v194 = vld [vmem:[#allocation9 + $0x20] sm:$0xff]
    %v195 = vld [vmem:[#allocation9 + $0x28] sm:$0xff]
    %v196 = vld [vmem:[#allocation9 + $0x30] sm:$0xff]
    %v197 = vld [vmem:[#allocation9 + $0x38] sm:$0xff]
    %v198 = vld [vmem:[#allocation9 + $0x40] sm:$0xff]
    %v199 = vld [vmem:[#allocation9 + $0x48] sm:$0xff]
    %v200 = vld [vmem:[#allocation9 + $0x50] sm:$0xff]
    %v201 = vld [vmem:[#allocation9 + $0x58] sm:$0xff]
    %v202 = vld [vmem:[#allocation9 + $0x60] sm:$0xff]
    %v203 = vld [vmem:[#allocation9 + $0x68] sm:$0xff]
    %v204 = vld [vmem:[#allocation9 + $0x70] sm:$0xff]
    %v205 = vld [vmem:[#allocation9 + $0x78] sm:$0xff]
    %v206 = vld [vmem:[%s5] sm:$0x1]
    %v208 = vperm.slane %v206, 0
    %210 = vmatpush.msra.mxu0 %v205
    %211 = vmatpush.msra.mxu0 %v204
    %212 = vmatpush.msra.mxu0 %v203
    %213 = vmatpush.msra.mxu0 %v202
    %214 = vmatpush.msra.mxu0 %v201
    %215 = vmatpush.msra.mxu0 %v200
    %216 = vmatpush.msra.mxu0 %v199
    %217 = vmatpush.msra.mxu0 %v198
    %218 = vmatpush.msra.mxu0 %v197
    %219 = vmatpush.msra.mxu0 %v196
    %220 = vmatpush.msra.mxu0 %v195
    %221 = vmatpush.msra.mxu0 %v194
    %222 = vmatpush.msra.mxu0 %v193
    %223 = vmatpush.msra.mxu0 %v192
    %224 = vmatpush.msra.mxu0 %v191
    %225 = vmatpush.msra.mxu0 %v190
    %226 = vmatmul.f32.gmra.mxu0 %v189
    %v227 = vpop.f32.mrf.mxu0
    %v228 = vadd.f32 %v208, %v227
    %229 = vdwg.mxu0
    %v230 = vmax.f32 %v228, 0.0
    %v231 = vmin.f32 %v228, 0.0
    %v232 = vstv %s141
    %v233 = vmul.f32 %v232, %v231
    %v234 = vadd.f32 %v230, %v233
    %v235 = vld [vmem:[#allocation10] sm:$0xff]
    %v236 = vld [vmem:[#allocation10 + $0x8] sm:$0xff]
    %v237 = vld [vmem:[#allocation10 + $0x10] sm:$0xff]
    %v238 = vld [vmem:[#allocation10 + $0x18] sm:$0xff]
    %v239 = vld [vmem:[#allocation10 + $0x20] sm:$0xff]
    %v240 = vld [vmem:[#allocation10 + $0x28] sm:$0xff]
    %v241 = vld [vmem:[#allocation10 + $0x30] sm:$0xff]
    %v242 = vld [vmem:[#allocation10 + $0x38] sm:$0xff]
    %v243 = vld [vmem:[#allocation10 + $0x40] sm:$0xff]
    %v244 = vld [vmem:[#allocation10 + $0x48] sm:$0xff]
    %v245 = vld [vmem:[#allocation10 + $0x50] sm:$0xff]
    %v246 = vld [vmem:[#allocation10 + $0x58] sm:$0xff]
    %v247 = vld [vmem:[#allocation10 + $0x60] sm:$0xff]
    %v248 = vld [vmem:[#allocation10 + $0x68] sm:$0xff]
    %v249 = vld [vmem:[#allocation10 + $0x70] sm:$0xff]
    %v250 = vld [vmem:[#allocation10 + $0x78] sm:$0xff]
    %v251 = vld [vmem:[%s7] sm:$0x1]
    %v253 = vperm.slane %v251, 0
    %255 = vmatpush.msra.mxu0 %v250
    %256 = vmatpush.msra.mxu0 %v249
    %257 = vmatpush.msra.mxu0 %v248
    %258 = vmatpush.msra.mxu0 %v247
    %259 = vmatpush.msra.mxu0 %v246
    %260 = vmatpush.msra.mxu0 %v245
    %261 = vmatpush.msra.mxu0 %v244
    %262 = vmatpush.msra.mxu0 %v243
    %263 = vmatpush.msra.mxu0 %v242
    %264 = vmatpush.msra.mxu0 %v241
    %265 = vmatpush.msra.mxu0 %v240
    %266 = vmatpush.msra.mxu0 %v239
    %267 = vmatpush.msra.mxu0 %v238
    %268 = vmatpush.msra.mxu0 %v237
    %269 = vmatpush.msra.mxu0 %v236
    %270 = vmatpush.msra.mxu0 %v235
    %271 = vmatmul.f32.gmra.mxu0 %v234
    %v272 = vpop.f32.mrf.mxu0
    %v273 = vadd.f32 %v253, %v272
    %274 = vdwg.mxu0
    %v275 = vmax.f32 %v273, 0.0
    %v276 = vmin.f32 %v273, 0.0
    %v277 = vstv %s142
    %v278 = vmul.f32 %v277, %v276
    %v279 = vadd.f32 %v275, %v278
    %v280 = vld [vmem:[#allocation12] sm:$0xff]
    %v281 = vld [vmem:[#allocation12 + $0x8] sm:$0xff]
    %v282 = vld [vmem:[#allocation12 + $0x10] sm:$0xff]
    %v283 = vld [vmem:[#allocation12 + $0x18] sm:$0xff]
    %v284 = vld [vmem:[#allocation12 + $0x20] sm:$0xff]
    %v285 = vld [vmem:[#allocation12 + $0x28] sm:$0xff]
    %v286 = vld [vmem:[#allocation12 + $0x30] sm:$0xff]
    %v287 = vld [vmem:[#allocation12 + $0x38] sm:$0xff]
    %v288 = vld [vmem:[#allocation12 + $0x40] sm:$0xff]
    %v289 = vld [vmem:[#allocation12 + $0x48] sm:$0xff]
    %v290 = vld [vmem:[#allocation12 + $0x50] sm:$0xff]
    %v291 = vld [vmem:[#allocation12 + $0x58] sm:$0xff]
    %v292 = vld [vmem:[#allocation12 + $0x60] sm:$0xff]
    %v293 = vld [vmem:[#allocation12 + $0x68] sm:$0xff]
    %v294 = vld [vmem:[#allocation12 + $0x70] sm:$0xff]
    %v295 = vld [vmem:[#allocation12 + $0x78] sm:$0xff]
    %v296 = vld [vmem:[%s9] sm:$0x1]
    %v298 = vperm.slane %v296, 0
    %300 = vmatpush.msra.mxu0 %v295
    %301 = vmatpush.msra.mxu0 %v294
    %302 = vmatpush.msra.mxu0 %v293
    %303 = vmatpush.msra.mxu0 %v292
    %304 = vmatpush.msra.mxu0 %v291
    %305 = vmatpush.msra.mxu0 %v290
    %306 = vmatpush.msra.mxu0 %v289
    %307 = vmatpush.msra.mxu0 %v288
    %308 = vmatpush.msra.mxu0 %v287
    %309 = vmatpush.msra.mxu0 %v286
    %310 = vmatpush.msra.mxu0 %v285
    %311 = vmatpush.msra.mxu0 %v284
    %312 = vmatpush.msra.mxu0 %v283
    %313 = vmatpush.msra.mxu0 %v282
    %314 = vmatpush.msra.mxu0 %v281
    %315 = vmatpush.msra.mxu0 %v280
    %316 = vmatmul.f32.gmra.mxu0 %v279
    %v317 = vpop.f32.mrf.mxu0
    %v318 = vadd.f32 %v298, %v317
    %319 = vdwg.mxu0
    %v320 = vmax.f32 %v318, 0.0
    %v321 = vmin.f32 %v318, 0.0
    %v322 = vstv %s143
    %v323 = vmul.f32 %v322, %v321
    %v324 = vadd.f32 %v320, %v323
    %v325 = vld [vmem:[#allocation13] sm:$0xff]
    %v326 = vld [vmem:[#allocation13 + $0x8] sm:$0xff]
    %v327 = vld [vmem:[#allocation13 + $0x10] sm:$0xff]
    %v328 = vld [vmem:[#allocation13 + $0x18] sm:$0xff]
    %v329 = vld [vmem:[#allocation13 + $0x20] sm:$0xff]
    %v330 = vld [vmem:[#allocation13 + $0x28] sm:$0xff]
    %v331 = vld [vmem:[#allocation13 + $0x30] sm:$0xff]
    %v332 = vld [vmem:[#allocation13 + $0x38] sm:$0xff]
    %v333 = vld [vmem:[#allocation13 + $0x40] sm:$0xff]
    %v334 = vld [vmem:[#allocation13 + $0x48] sm:$0xff]
    %v335 = vld [vmem:[#allocation13 + $0x50] sm:$0xff]
    %v336 = vld [vmem:[#allocation13 + $0x58] sm:$0xff]
    %v337 = vld [vmem:[#allocation13 + $0x60] sm:$0xff]
    %v338 = vld [vmem:[#allocation13 + $0x68] sm:$0xff]
    %v339 = vld [vmem:[#allocation13 + $0x70] sm:$0xff]
    %v340 = vld [vmem:[#allocation13 + $0x78] sm:$0xff]
    %v341 = vld [vmem:[%s11] sm:$0x1]
    %v343 = vperm.slane %v341, 0
    %345 = vmatpush.msra.mxu0 %v340
    %346 = vmatpush.msra.mxu0 %v339
    %347 = vmatpush.msra.mxu0 %v338
    %348 = vmatpush.msra.mxu0 %v337
    %349 = vmatpush.msra.mxu0 %v336
    %350 = vmatpush.msra.mxu0 %v335
    %351 = vmatpush.msra.mxu0 %v334
    %352 = vmatpush.msra.mxu0 %v333
    %353 = vmatpush.msra.mxu0 %v332
    %354 = vmatpush.msra.mxu0 %v331
    %355 = vmatpush.msra.mxu0 %v330
    %356 = vmatpush.msra.mxu0 %v329
    %357 = vmatpush.msra.mxu0 %v328
    %358 = vmatpush.msra.mxu0 %v327
    %359 = vmatpush.msra.mxu0 %v326
    %360 = vmatpush.msra.mxu0 %v325
    %361 = vmatmul.f32.gmra.mxu0 %v324
    %v362 = vpop.f32.mrf.mxu0
    %v363 = vadd.f32 %v343, %v362
    %364 = vdwg.mxu0
    %365 = vst [vmem:[#allocation15] sm:$0xff] %v363
    // Predicated region
    $region70: #{tpu_custom_call.1} parent=1 // pred_check
      _
    $region71: #{tpu_custom_call.1} parent=1 // pred_check_branch
      %367 = sbr.rel (0) target = $region73
    $region72: #{tpu_custom_call.1} parent=1 // pred_region
      %369 = vsyncadd [#allocation6], 0
      %s371 = sshll.u32 [#allocation15], 4
      %s372 = int_to_ptr.vmem [resolvable:$true] %s371
      %s373 = sshll.u32 %s12, 4
      %s374 = int_to_ptr.hbm [resolvable:$true] %s373
      %376 = dma.vmem_to_hbm [thread:$0]  %s372, 128, %s374, [#allocation6]
    $region73: #{tpu_custom_call.1} parent=1 // pred_fallthru
      _
    // Predicated region
    $region74: #{tpu_custom_call.1} parent=1 // pred_check
      _
    $region75: #{tpu_custom_call.1} parent=1 // pred_check_branch
      %378 = sbr.rel (0) target = $region77
    $region76: #{tpu_custom_call.1} parent=1 // pred_region
      %380 = dma.done [#allocation6], 128
    $region77: #{tpu_custom_call.1} parent=1 // pred_fallthru
      _
    %381 = vsyncpa [#allocation5], 1
    %382 = vsyncpa [#allocation8], 1
    %383 = vsyncpa [#allocation11], 1
    %384 = vsyncpa [#allocation14], 1
    %385 = vsyncpa [#allocation6], 1

</llo_original>
